<compile_context>
chip_gen: v7x
topology: tpu7x:2x2x1
jax: 0.10.0
libtpu: 0.0.40
codegen_flags: <defaults>
</compile_context>

<pallas_src>
import functools
import math

import jax
import jax.numpy as jnp
from jax.experimental import pallas as pl
from jax.experimental.pallas import tpu as pltpu

_MiB = 1024 * 1024
_COLS = 512        # lane-dense width (multiple of 128 -> unmasked vld/vst)
_CHUNK_ROWS = 512  # accumulation slab rows (multiple of 8/16/32 sublane packs)


def _vmem_limit_bytes():
    """Generation-aware scoped-VMEM request (conservative 64 MiB fallback)."""
    cap = 64 * _MiB  # v7x per-TC physical VMEM; safe everywhere
    try:
        cap = int(pltpu.get_tpu_info().vmem_capacity_bytes)
    except Exception:
        pass
    return max(32 * _MiB, min(cap - 8 * _MiB, 96 * _MiB))


def _make_plan(shape, dtype):
    """Static tiling plan (all Python ints) for a given input shape/dtype."""
    total = int(math.prod(shape))
    itemsize = jnp.dtype(dtype).itemsize
    rows = total // _COLS
    rem = total - rows * _COLS

    plan = dict(total=total, rows=rows, rem=rem, cols=_COLS, itemsize=itemsize,
                use_kernel=rows > 0)
    if rows == 0:
        return plan

    vmem_limit = _vmem_limit_bytes()
    # 2 inputs x 2 pipeline buffers + accumulator / chunk temporaries must fit.
    block_bytes = max(1 * _MiB, min((vmem_limit - 10 * _MiB) // 4, 16 * _MiB))

    if rows <= _CHUNK_ROWS:
        block_rows = rows          # single block == full array dims (any rows)
        chunk_rows = rows
    else:
        budget_rows = max(
            _CHUNK_ROWS,
            (block_bytes // (_COLS * itemsize)) // _CHUNK_ROWS * _CHUNK_ROWS)
        block_rows = min(budget_rows, (rows // _CHUNK_ROWS) * _CHUNK_ROWS)
        chunk_rows = _CHUNK_ROWS

    n_blocks = -(-rows // block_rows)
    valid_last = rows - (n_blocks - 1) * block_rows   # rows in last real block
    # v7x: split the streamed blocks across the 2 TensorCores.  On 1-TC chips
    # (v5e/v6e) the "parallel" axis simply runs sequentially.
    n_split = 2 if n_blocks >= 2 else 1
    blocks_per_split = -(-n_blocks // n_split)

    plan.update(block_rows=block_rows, chunk_rows=chunk_rows,
                n_blocks=n_blocks, n_chunks=block_rows // chunk_rows,
                valid_last=valid_last, n_split=n_split,
                blocks_per_split=blocks_per_split, vmem_limit=vmem_limit)
    return plan


def _split_main_tail(a, plan):
    """Lane-dense (rows, 512) main slab + flat sub-512 tail — no padding copy."""
    flat = a.reshape(-1)
    n_main = plan["rows"] * plan["cols"]
    main = None
    if plan["rows"]:
        main = flat[:n_main].reshape(plan["rows"], plan["cols"])
    tail = flat[n_main:] if plan["rem"] else None
    return main, tail


def _mse_sum_kernel(x_ref, t_ref, out_ref, acc_ref, *, cols, chunk_rows,
                    n_chunks, rows, n_blocks, blocks_per_split, n_split,
                    valid_last):
    """Accumulates sum((x - t)^2) over this core's row-blocks.

    Grid is (n_split, blocks_per_split): the leading axis is "parallel"
    (2 TensorCores on v7x, sequential elsewhere); the trailing axis streams
    row-blocks.  out_ref[0, 0] receives this core's partial sum.
    """
    c = pl.program_id(0)
    j = pl.program_id(1)
    g = c * blocks_per_split + j            # global row-block index

    @pl.when(j == 0)
    def _():
        acc_ref[...] = jnp.zeros_like(acc_ref)

    def accum_block(valid_rows):
        # Chunked accumulation keeps the f32 temporaries chunk-sized (not
        # block-sized); pure VPU adds into the accumulator, no per-chunk
        # cross-lane work.
        static_valid = isinstance(valid_rows, int)
        for ci in range(n_chunks):
            r0 = ci * chunk_rows
            if static_valid:
                v = min(max(valid_rows - r0, 0), chunk_rows)
                if v == 0:
                    continue              # statically dead chunk
                need_mask = v < chunk_rows
            else:
                v = valid_rows - r0       # traced; <= 0 masks everything
                need_mask = True
            xc = x_ref[r0:r0 + chunk_rows, :].astype(jnp.float32)
            tc = t_ref[r0:r0 + chunk_rows, :].astype(jnp.float32)
            d = xc - tc
            if need_mask:
                rid = jax.lax.broadcasted_iota(jnp.int32, (chunk_rows, cols), 0)
                d = jnp.where(rid < v, d, jnp.float32(0.0))
            acc_ref[...] += d * d

    block_rows = n_chunks * chunk_rows
    ragged = valid_last < block_rows
    has_phantom = n_split * blocks_per_split > n_blocks

    if not ragged and not has_phantom:
        accum_block(block_rows)
    else:
        @pl.when(g < n_blocks - 1)
        def _():
            accum_block(block_rows)

        if has_phantom:
            # Last real block is ragged-masked at runtime; phantom blocks
            # (possible only when n_blocks is odd) mask to zero contribution.
            @pl.when(g >= n_blocks - 1)
            def _():
                accum_block(rows - g * block_rows)
        else:
            @pl.when(g == n_blocks - 1)
            def _():
                accum_block(valid_last)

    @pl.when(j == blocks_per_split - 1)
    def _():
        # Single cross-lane reduction per core, once per call.
        out_ref[0, 0] = jnp.sum(acc_ref[...])


def _mse_main_sum(x_main, t_main, plan):
    """Pallas HBM-streaming sum((x - t)^2) over the (rows, 512) main slab."""
    bpc = plan["blocks_per_split"]
    n_blocks = plan["n_blocks"]
    block_rows = plan["block_rows"]
    cols = plan["cols"]

    if plan["n_split"] * bpc > n_blocks:
        def row_block(c, j):
            # Clamp phantom blocks onto the last real block; the kernel masks
            # their contribution to zero.
            return (jnp.minimum(c * bpc + j, n_blocks - 1), 0)
    else:
        def row_block(c, j):
            return (c * bpc + j, 0)

    kernel = functools.partial(
        _mse_sum_kernel,
        cols=cols,
        chunk_rows=plan["chunk_rows"],
        n_chunks=plan["n_chunks"],
        rows=plan["rows"],
        n_blocks=n_blocks,
        blocks_per_split=bpc,
        n_split=plan["n_split"],
        valid_last=plan["valid_last"],
    )

    partials = pl.pallas_call(
        kernel,
        out_shape=jax.ShapeDtypeStruct((plan["n_split"], 1), jnp.float32),
        grid_spec=pltpu.PrefetchScalarGridSpec(
            num_scalar_prefetch=0,
            grid=(plan["n_split"], bpc),
            in_specs=[
                pl.BlockSpec((block_rows, cols), row_block),
                pl.BlockSpec((block_rows, cols), row_block),
            ],
            out_specs=pl.BlockSpec((1, 1), lambda c, j: (c, 0),
                                   memory_space=pltpu.SMEM),
            scratch_shapes=[pltpu.VMEM((plan["chunk_rows"], cols), jnp.float32)],
        ),
        compiler_params=pltpu.CompilerParams(
            dimension_semantics=("parallel", "arbitrary"),
            vmem_limit_bytes=plan["vmem_limit"],
        ),
        cost_estimate=pl.CostEstimate(
            flops=3 * plan["rows"] * cols,
            bytes_accessed=2 * plan["rows"] * cols * plan["itemsize"] + 8,
            transcendentals=0,
        ),
    )(x_main, t_main)
    return jnp.sum(partials)


def _mse_loss_from_prepared(x, t_main, t_tail, plan):
    """MSE(x, target) using the pre-laid-out target pieces."""
    x_main, x_tail = _split_main_tail(x, plan)
    total_sq = jnp.float32(0.0)
    if plan["use_kernel"]:
        total_sq = _mse_main_sum(x_main, t_main, plan)
    if plan["rem"]:
        d = x_tail.astype(jnp.float32) - t_tail.astype(jnp.float32)
        total_sq = total_sq + jnp.sum(d * d)
    return total_sq / jnp.float32(plan["total"])


class ContentLoss:
    """Pallas-TPU ContentLoss: forward(x) returns x unchanged, stores MSE loss."""

    def __init__(self, target):
        self.target = jax.lax.stop_gradient(target)        # .detach()
        self._plan = _make_plan(self.target.shape, self.target.dtype)
        # Target is a fixed buffer: lay it out lane-dense once at setup so the
        # per-forward path never re-lays-out or pads the target.
        self._t_main, self._t_tail = _split_main_tail(self.target, self._plan)
        self.loss = None

    def forward(self, x):
        assert x.shape == self.target.shape, "input/target shape mismatch"
        self.loss = _mse_loss_from_prepared(x, self._t_main, self._t_tail,
                                            self._plan)
        return x                                            # identity pass-through

    __call__ = forward


def content_loss_forward(x, target):
    """Functional one-shot form: returns (input_passthrough, mse_loss)."""
    module = ContentLoss(target)
    out = module.forward(x)
    return out, module.loss


if __name__ == "__main__":
    key = jax.random.PRNGKey(0)

    # Primary small NCHW shape consistent with the module, plus two extra small
    # shapes exercising the ragged-tail and multi-block / core-split paths.
    shapes = [
        (2, 4, 16, 16),     # 2048 elems: single block, single chunk
        (2, 3, 17, 19),     # 1938 elems: sub-512 tail finished in plain JAX
        (2, 16, 128, 80),   # 327680 elems: 2 blocks, core split, masked last block
    ]

    for idx, shape in enumerate(shapes):
        k_in, k_tgt = jax.random.split(jax.random.fold_in(key, idx))
        x = jax.random.normal(k_in, shape, dtype=jnp.float32)
        target = jax.random.normal(k_tgt, shape, dtype=jnp.float32)

        module = ContentLoss(target)
        out = jax.block_until_ready(module.forward(x))
        loss = jax.block_until_ready(module.loss)

        ref_loss = jnp.mean((x - target) ** 2)
        assert out.shape == x.shape and bool(jnp.array_equal(out, x))
        assert jnp.allclose(loss, ref_loss, rtol=1e-4, atol=1e-6), (
            shape, float(loss), float(ref_loss))

    print("KERNEL_OK")
</pallas_src>

<mosaic_0001>
module attributes {stable_mosaic.version = 11 : i64} {
  func.func @_mse_sum_kernel(%arg0: i32, %arg1: i32, %arg2: memref<4x512xf32, #tpu.memory_space<vmem>>, %arg3: memref<4x512xf32, #tpu.memory_space<vmem>>, %arg4: memref<1x1xf32, #tpu.memory_space<smem>>, %arg5: memref<4x512xf32, #tpu.memory_space<vmem>>) attributes {dimension_semantics = [#tpu.dimension_semantics<parallel>, #tpu.dimension_semantics<arbitrary>], iteration_bounds = array<i64: 1, 1>, scalar_prefetch = 0 : i64, scratch_operands = 1 : i64, tpu.core_type = #tpu.core_type<tc>, window_params = [{transform_indices = @transform_0, window_bounds = array<i64: 4, 512>}, {transform_indices = @transform_1, window_bounds = array<i64: 4, 512>}, {transform_indices = @transform_2, window_bounds = array<i64: 1, 1>}]} {
    %c0_i32 = arith.constant 0 : i32
    %0 = arith.cmpi eq, %arg1, %c0_i32 : i32
    %1 = arith.extui %0 : i1 to i32
    %c0_i32_0 = arith.constant 0 : i32
    %2 = arith.cmpi ne, %1, %c0_i32_0 : i32
    scf.if %2 {
      %cst = arith.constant 0.000000e+00 : f32
      %13 = vector.broadcast %cst : f32 to vector<4x512xf32>
      %c0_10 = arith.constant 0 : index
      %c0_11 = arith.constant 0 : index
      %14 = vector.load %arg5[%c0_10, %c0_11] : memref<4x512xf32, #tpu.memory_space<vmem>>, vector<4x512xf32>
      tpu.vector_store %arg5[%c0_10, %c0_11], %13 {strides = array<i32>} : memref<4x512xf32, #tpu.memory_space<vmem>>, vector<4x512xf32>,
    } else {
    }
    %c0 = arith.constant 0 : index
    %c0_1 = arith.constant 0 : index
    %3 = vector.load %arg2[%c0, %c0_1] : memref<4x512xf32, #tpu.memory_space<vmem>>, vector<4x512xf32>
    %c0_2 = arith.constant 0 : index
    %c0_3 = arith.constant 0 : index
    %4 = vector.load %arg3[%c0_2, %c0_3] : memref<4x512xf32, #tpu.memory_space<vmem>>, vector<4x512xf32>
    %5 = arith.subf %3, %4 : vector<4x512xf32>
    %c0_4 = arith.constant 0 : index
    %c0_5 = arith.constant 0 : index
    %6 = vector.load %arg5[%c0_4, %c0_5] : memref<4x512xf32, #tpu.memory_space<vmem>>, vector<4x512xf32>
    %7 = arith.mulf %5, %5 : vector<4x512xf32>
    %8 = arith.addf %6, %7 : vector<4x512xf32>
    %c0_6 = arith.constant 0 : index
    %c0_7 = arith.constant 0 : index
    %9 = vector.load %arg5[%c0_6, %c0_7] : memref<4x512xf32, #tpu.memory_space<vmem>>, vector<4x512xf32>
    tpu.vector_store %arg5[%c0_6, %c0_7], %8 {strides = array<i32>} : memref<4x512xf32, #tpu.memory_space<vmem>>, vector<4x512xf32>,
    %c0_i32_8 = arith.constant 0 : i32
    %10 = arith.cmpi eq, %arg1, %c0_i32_8 : i32
    %11 = arith.extui %10 : i1 to i32
    %c0_i32_9 = arith.constant 0 : i32
    %12 = arith.cmpi ne, %11, %c0_i32_9 : i32
    scf.if %12 {
      %c0_10 = arith.constant 0 : index
      %c0_11 = arith.constant 0 : index
      %13 = vector.load %arg5[%c0_10, %c0_11] : memref<4x512xf32, #tpu.memory_space<vmem>>, vector<4x512xf32>
      %14 = vector.shape_cast %13 : vector<4x512xf32> to vector<1x4x512xf32>
      %cst = arith.constant dense<0.000000e+00> : vector<1xf32>
      %15 = vector.multi_reduction <add>, %14, %cst [1, 2] : vector<1x4x512xf32> to vector<1xf32>
      %16 = vector.shape_cast %15 : vector<1xf32> to vector<1x1x1xf32>
      %17 = vector.extract %16[0, 0, 0] : f32 from vector<1x1x1xf32>
      %c0_12 = arith.constant 0 : index
      %c0_13 = arith.constant 0 : index
      %18 = memref.load %arg4[%c0_12, %c0_13] : memref<1x1xf32, #tpu.memory_space<smem>>
      memref.store %17, %arg4[%c0_12, %c0_13] : memref<1x1xf32, #tpu.memory_space<smem>>
    } else {
    }
    return
  }
  func.func @transform_0(%arg0: i32, %arg1: i32) -> (i32, i32) {
    %c1_i32 = arith.constant 1 : i32
    %0 = arith.muli %arg0, %c1_i32 : i32
    %1 = arith.addi %0, %arg1 : i32
    %c0_i32 = arith.constant 0 : i32
    %c0_i32_0 = arith.constant 0 : i32
    return %1, %c0_i32 : i32, i32
  }
  func.func @transform_1(%arg0: i32, %arg1: i32) -> (i32, i32) {
    %c1_i32 = arith.constant 1 : i32
    %0 = arith.muli %arg0, %c1_i32 : i32
    %1 = arith.addi %0, %arg1 : i32
    %c0_i32 = arith.constant 0 : i32
    %c0_i32_0 = arith.constant 0 : i32
    return %1, %c0_i32 : i32, i32
  }
  func.func @transform_2(%arg0: i32, %arg1: i32) -> (i32, i32) {
    %c0_i32 = arith.constant 0 : i32
    %c0_i32_0 = arith.constant 0 : i32
    return %arg0, %c0_i32 : i32, i32
  }
}

</mosaic_0001>

<llo_original>
// kernel: tpu_custom_call.1
$region0: #{tpu_custom_call.1}
  #allocation0 [shape = 'u32[]', space=smem, size = 0x4, offset = 0x4, fixed_abs, tag = 'smem constant byte address 0x4 - core index']
  #allocation1 [shape = 'u32[144,128]{1,0:T(1,128)}', space=vmem, size = 0x12000, scoped, tag = 'internal scratch']
  #allocation2 [shape = 'f32[4,512]{1,0:T(4,128)}', space=vmem, size = 0x2000, scoped, tag = 'scratch operand']
  %s0 = inlined_call_operand.hbm [shape: f32[4,512], index: 0, kind: input, shape index: {}]
  %s1 = inlined_call_operand.hbm [shape: f32[4,512], index: 1, kind: input, shape index: {}]
  %s2 = inlined_call_operand.hbm [shape: f32[1,1], index: 2, kind: output, shape index: {}]
  %s3 = sld [smem:[#allocation0]]
  $region34: #{tpu_custom_call.1} parent=0
    _
  %s5 = ssub.s32 1, %s3
  %s6 = scalar_select 0, %s5, %s3
  $region1: #{tpu_custom_call.1} parent=0
    #allocation3 [shape = 'u8[8192]{0}', space=vmem, size = 0x2000, scoped, tag = 'input window, operand 0, single buffered']
    #allocation4 [shape = 's32[1]{0}', space=sflag, size = 0x4, scoped, tag = 'scoped memory for tpu_custom_call.1']
    #allocation5 [shape = 's32[1]{0}', space=sflag, size = 0x4, scoped, tag = 'scoped memory for tpu_custom_call.1']
    #allocation6 [shape = 'u8[8192]{0}', space=vmem, size = 0x2000, scoped, tag = 'input window, operand 1, single buffered']
    #allocation7 [shape = 's32[1]{0}', space=sflag, size = 0x4, scoped, tag = 'scoped memory for tpu_custom_call.1']
    #allocation8 [shape = 'u8[512]{0}', space=smem, size = 0x200, scoped, tag = 'output window, operand 0, single buffered']
    %7 = vsyncpa [#allocation4], 0
    %8 = vsyncpa [#allocation7], 0
    %9 = vsyncpa [#allocation5], 0
    // Predicated region
    $region2: #{tpu_custom_call.1} parent=1 // pred_check
      _
    $region3: #{tpu_custom_call.1} parent=1 // pred_check_branch
      %11 = sbr.rel (0) target = $region5
    $region4: #{tpu_custom_call.1} parent=1 // pred_region
      %s12 = sadd.s32 0, 0
      %s14 = ssub.s32 256, 256
      %15 = vsyncadd [#allocation4], %s14
      %s16 = smul.addr %s12, 4
      %s17 = smul.addr %s16, 64
      %s18 = scalar_lea.hbm %s0, %s17
      %s20 = sshll.u32 [#allocation3], 4
      %s21 = int_to_ptr.vmem [resolvable:$true] %s20
      %23 = dma.hbm_to_vmem [thread:$0]  %s18, 256, %s21, [#allocation4]
    $region5: #{tpu_custom_call.1} parent=1 // pred_fallthru
      _
    // Predicated region
    $region6: #{tpu_custom_call.1} parent=1 // pred_check
      _
    $region7: #{tpu_custom_call.1} parent=1 // pred_check_branch
      %25 = sbr.rel (0) target = $region9
    $region8: #{tpu_custom_call.1} parent=1 // pred_region
      %s26 = sadd.s32 0, 0
      %s28 = ssub.s32 256, 256
      %29 = vsyncadd [#allocation7], %s28
      %s30 = smul.addr %s26, 4
      %s31 = smul.addr %s30, 64
      %s32 = scalar_lea.hbm %s1, %s31
      %s34 = sshll.u32 [#allocation6], 4
      %s35 = int_to_ptr.vmem [resolvable:$true] %s34
      %37 = dma.hbm_to_vmem [thread:$0]  %s32, 256, %s35, [#allocation7]
    $region9: #{tpu_custom_call.1} parent=1 // pred_fallthru
      _
    // Predicated region
    $region10: #{tpu_custom_call.1} parent=1 // pred_check
      _
    $region11: #{tpu_custom_call.1} parent=1 // pred_check_branch
      %39 = sbr.rel (0) target = $region13
    $region12: #{tpu_custom_call.1} parent=1 // pred_region
      %40 = dma.done [#allocation4], 256
    $region13: #{tpu_custom_call.1} parent=1 // pred_fallthru
      _
    // Predicated region
    $region14: #{tpu_custom_call.1} parent=1 // pred_check
      _
    $region15: #{tpu_custom_call.1} parent=1 // pred_check_branch
      %42 = sbr.rel (0) target = $region17
    $region16: #{tpu_custom_call.1} parent=1 // pred_region
      %43 = dma.done [#allocation7], 256
    $region17: #{tpu_custom_call.1} parent=1 // pred_fallthru
      _
    %s44 = sadd.s32 0, 0
    %s45 = sadd.s32 0, 0
    %p46 = scmp.eq.s32.totalorder 0, 0
    // Predicated region
    $region18: #{tpu_custom_call.1} parent=1 // pred_check
      %p47 = pneg %p46
    $region19: #{tpu_custom_call.1} parent=1 // pred_check_branch
      %49 = sbr.rel (%p47) target = $region21
    $region20: #{tpu_custom_call.1} parent=1 // pred_region
      %50 = vst [vmem:[#allocation2] sm:$0xff] 0.0
      %51 = vst [vmem:[#allocation2 + $0x8] sm:$0xff] 0.0
    $region21: #{tpu_custom_call.1} parent=1 // pred_fallthru
      _
    %v52 = vld [vmem:[#allocation3] sm:$0xff]
    %v53 = vld [vmem:[#allocation3 + $0x8] sm:$0xff]
    %v54 = vld [vmem:[#allocation6] sm:$0xff]
    %v55 = vld [vmem:[#allocation6 + $0x8] sm:$0xff]
    %v56 = vsub.f32 %v52, %v54
    %v57 = vsub.f32 %v53, %v55
    %v58 = vld [vmem:[#allocation2] sm:$0xff]
    %v59 = vld [vmem:[#allocation2 + $0x8] sm:$0xff]
    %v60 = vmul.f32 %v56, %v56
    %v61 = vmul.f32 %v57, %v57
    %v62 = vadd.f32 %v58, %v60
    %v63 = vadd.f32 %v59, %v61
    %64 = vst [vmem:[#allocation2] sm:$0xff] %v62
    %65 = vst [vmem:[#allocation2 + $0x8] sm:$0xff] %v63
    // Predicated region
    $region22: #{tpu_custom_call.1} parent=1 // pred_check
      %p66 = pneg %p46
    $region23: #{tpu_custom_call.1} parent=1 // pred_check_branch
      %68 = sbr.rel (%p66) target = $region25
    $region24: #{tpu_custom_call.1} parent=1 // pred_region
      %v69 = vld [vmem:[#allocation2] sm:$0xff]
      %v70 = vld [vmem:[#allocation2 + $0x8] sm:$0xff]
      %v73 = vcombine.high %v69, %v69
      %v74 = vcombine.high %v70, %v70
      %vm77 = vcmask 1043456
      %v78 = vsel %vm77, %v69, 0.0
      %v79 = vsel %vm77, %v73, 0.0
      %v80 = vadd.f32 %v78, %v79
      %v81 = vsel %vm77, %v70, 0.0
      %v82 = vadd.f32 %v80, %v81
      %v83 = vsel %vm77, %v74, 0.0
      %v84 = vadd.f32 %v82, %v83
      %85 = vadd.xlane.f32.xlu0 %v84
      %v86 = vpop.xlane.xlu0 %85
      %v87 = vrot.slane %v86, 4
      %v88 = vadd.f32 %v86, %v87
      %v89 = vrot.slane %v88, 2
      %v90 = vadd.f32 %v88, %v89
      %v91 = vrot.slane %v90, 1
      %v92 = vadd.f32 %v90, %v91
      %s93 = vtos %v92
      %s94 = scalar_lea.smem [#allocation8], 0
      %95 = sst [smem:[%s94]] %s93
    $region25: #{tpu_custom_call.1} parent=1 // pred_fallthru
      _
    // Predicated region
    $region26: #{tpu_custom_call.1} parent=1 // pred_check
      _
    $region27: #{tpu_custom_call.1} parent=1 // pred_check_branch
      %97 = sbr.rel (0) target = $region29
    $region28: #{tpu_custom_call.1} parent=1 // pred_region
      %s99 = ssub.s32 16, 16
      %100 = vsyncadd [#allocation5], %s99
      %103 = dma.smem_to_hbm [#allocation8], 16, %s2, [#allocation5]
    $region29: #{tpu_custom_call.1} parent=1 // pred_fallthru
      _
    // Predicated region
    $region30: #{tpu_custom_call.1} parent=1 // pred_check
      _
    $region31: #{tpu_custom_call.1} parent=1 // pred_check_branch
      %105 = sbr.rel (0) target = $region33
    $region32: #{tpu_custom_call.1} parent=1 // pred_region
      %106 = dma.done [#allocation5], 16
    $region33: #{tpu_custom_call.1} parent=1 // pred_fallthru
      _
    %107 = sfence
    %108 = vsyncpa [#allocation4], 1
    %109 = vsyncpa [#allocation7], 1
    %110 = vsyncpa [#allocation5], 1

</llo_original>
